<compile_context>
chip_gen: v6e
topology: v6e:2x2x1
jax: 0.10.0
libtpu: 0.0.40
codegen_flags: <defaults>
</compile_context>

<pallas_src>
import functools

import jax
import jax.numpy as jnp
from jax.experimental import pallas as pl
from jax.experimental.pallas import tpu as pltpu

_LANE = 128
_SUBLANE = 8


def _round_up(x, m):
    return (x + m - 1) // m * m


def _silu(x):
    return x * jax.nn.sigmoid(x)


def _ann_kernel(x_ref, w_in_ref, b_in_ref, w_h_ref, b_h_ref, w_out_ref,
                b_out_ref, y_ref, *, n_hidden, out_activation, scale):
    # x / weights are already in the MXU dtype (bf16); accumulate in f32 and do
    # all elementwise math (bias, SiLU, tanh, scale) in f32 on the VPU/EUP.
    x = x_ref[...]
    mxu_dtype = w_in_ref.dtype

    # input -> hidden
    h = jnp.dot(x, w_in_ref[...], preferred_element_type=jnp.float32)
    h = _silu(h + b_in_ref[...])

    # hidden -> hidden (statically unrolled; only the first n_hidden layers of
    # the stacked weights are real — extras, if any, are skipped)
    for l in range(n_hidden):
        h = jnp.dot(h.astype(mxu_dtype), w_h_ref[l],
                    preferred_element_type=jnp.float32)
        h = _silu(h + b_h_ref[l])

    # hidden -> out
    y = jnp.dot(h.astype(mxu_dtype), w_out_ref[...],
                preferred_element_type=jnp.float32)
    y = y + b_out_ref[...]

    if out_activation == "tanh":
        y = jnp.tanh(y)
    if scale != 1.0:
        y = scale * y

    # Lane-dense store: n_out is padded to a multiple of 128 in the wrapper.
    y_ref[...] = y.astype(y_ref.dtype)


def ann_forward(x, params, *, n_hidden=None, out_activation=None, scale=1.0,
                block_b=None, mxu_dtype=jnp.bfloat16):
    """ANN forward pass as a single Pallas TPU kernel.

    x: [B, n_in] float32
    params (unpadded, f32):
       w_in  [n_in, nNodes]          b_in  [1, nNodes]
       w_h   [n_stack, nNodes, nNodes]   b_h [n_stack, 1, nNodes]
       w_out [nNodes, n_out]         b_out [1, n_out]
    n_hidden: number of real hidden->hidden layers (nLayers - 1).  May be 0.
    """
    B, n_in = x.shape
    n_nodes = params["w_in"].shape[1]
    n_out = params["w_out"].shape[1]
    n_stack = params["w_h"].shape[0]
    if n_hidden is None:
        n_hidden = n_stack
    assert 0 <= n_hidden <= n_stack

    # ---- pad feature dims to full 128-lane width, batch to block_b ----------
    n_in_p = _round_up(n_in, _LANE)
    n_nodes_p = _round_up(n_nodes, _LANE)
    n_out_p = _round_up(n_out, _LANE)

    if block_b is None:
        block_b = min(512, _round_up(B, _SUBLANE))
    block_b = _round_up(block_b, _SUBLANE)
    b_pad = _round_up(max(B, block_b), block_b)

    f32 = jnp.float32

    def pad2(a, r, c, dtype):
        return jnp.pad(a, ((0, r - a.shape[0]), (0, c - a.shape[1]))).astype(dtype)

    x_p = jnp.pad(x, ((0, b_pad - B), (0, n_in_p - n_in))).astype(mxu_dtype)
    w_in = pad2(params["w_in"], n_in_p, n_nodes_p, mxu_dtype)
    b_in = pad2(params["b_in"], 1, n_nodes_p, f32)
    w_h = jnp.pad(params["w_h"],
                  ((0, 0), (0, n_nodes_p - n_nodes), (0, n_nodes_p - n_nodes))
                  ).astype(mxu_dtype)
    b_h = jnp.pad(params["b_h"],
                  ((0, 0), (0, 0), (0, n_nodes_p - n_nodes))).astype(f32)
    w_out = pad2(params["w_out"], n_nodes_p, n_out_p, mxu_dtype)
    b_out = pad2(params["b_out"], 1, n_out_p, f32)

    # ---- cost estimate & VMEM budget ----------------------------------------
    flops = 2 * b_pad * (n_in_p * n_nodes_p
                         + n_hidden * n_nodes_p * n_nodes_p
                         + n_nodes_p * n_out_p)
    transcendentals = b_pad * n_nodes_p * (1 + n_hidden)
    if out_activation == "tanh":
        transcendentals += b_pad * n_out_p
    bytes_accessed = (x_p.size * 2 + b_pad * n_out_p * 4
                      + (w_in.size + w_h.size + w_out.size) * 2
                      + (b_in.size + b_h.size + b_out.size) * 4)
    cost = pl.CostEstimate(flops=int(flops),
                           transcendentals=int(transcendentals),
                           bytes_accessed=int(bytes_accessed))

    weight_bytes = ((w_in.size + w_h.size + w_out.size) * 2
                    + (b_in.size + b_h.size + b_out.size) * 4)
    tile_bytes = block_b * n_in_p * 2 + block_b * n_out_p * 4
    # double-buffered inputs/outputs + f32 working activations + headroom
    vmem_need = 2 * (weight_bytes + tile_bytes) + 4 * block_b * n_nodes_p * 4
    vmem_limit = int(min(max(vmem_need + (8 << 20), 32 << 20), 64 << 20))

    kernel = functools.partial(
        _ann_kernel,
        n_hidden=n_hidden,
        out_activation=out_activation,
        scale=float(scale),
    )

    grid = (b_pad // block_b,)
    y_p = pl.pallas_call(
        kernel,
        out_shape=jax.ShapeDtypeStruct((b_pad, n_out_p), x.dtype),
        grid_spec=pltpu.PrefetchScalarGridSpec(
            num_scalar_prefetch=0,
            grid=grid,
            in_specs=[
                pl.BlockSpec((block_b, n_in_p), lambda i: (i, 0)),         # x tile
                pl.BlockSpec((n_in_p, n_nodes_p), lambda i: (0, 0)),       # w_in
                pl.BlockSpec((1, n_nodes_p), lambda i: (0, 0)),            # b_in
                pl.BlockSpec((n_stack, n_nodes_p, n_nodes_p),
                             lambda i: (0, 0, 0)),                         # w_h stack
                pl.BlockSpec((n_stack, 1, n_nodes_p),
                             lambda i: (0, 0, 0)),                         # b_h stack
                pl.BlockSpec((n_nodes_p, n_out_p), lambda i: (0, 0)),      # w_out
                pl.BlockSpec((1, n_out_p), lambda i: (0, 0)),              # b_out
            ],
            out_specs=pl.BlockSpec((block_b, n_out_p), lambda i: (i, 0)),
        ),
        compiler_params=pltpu.CompilerParams(
            dimension_semantics=("parallel",),
            vmem_limit_bytes=vmem_limit,
        ),
        cost_estimate=cost,
    )(x_p, w_in, b_in, w_h, b_h, w_out, b_out)

    return y_p[:B, :n_out]


def init_ann_params(key, n_in, n_out, n_nodes, n_layers):
    """Deterministic init mimicking nn.Linear's uniform(-1/sqrt(fan_in), ...)."""
    n_hidden = n_layers - 1
    n_stack = max(n_hidden, 1)  # keep >=1 stacked layer for clean array shapes
    keys = jax.random.split(key, 6)

    def uni(k, shape, fan_in):
        bound = 1.0 / jnp.sqrt(jnp.float32(fan_in))
        return jax.random.uniform(k, shape, jnp.float32, -bound, bound)

    params = dict(
        w_in=uni(keys[0], (n_in, n_nodes), n_in),
        b_in=uni(keys[1], (1, n_nodes), n_in),
        w_h=uni(keys[2], (n_stack, n_nodes, n_nodes), n_nodes),
        b_h=uni(keys[3], (n_stack, 1, n_nodes), n_nodes),
        w_out=uni(keys[4], (n_nodes, n_out), n_nodes),
        b_out=uni(keys[5], (1, n_out), n_nodes),
    )
    return params, n_hidden


def ann_reference_f32(x, params, n_hidden, out_activation, scale):
    """Pure f32 reference matching the PyTorch module semantics."""
    h = _silu(x @ params["w_in"] + params["b_in"])
    for l in range(n_hidden):
        h = _silu(h @ params["w_h"][l] + params["b_h"][l])
    y = h @ params["w_out"] + params["b_out"]
    if out_activation == "tanh":
        y = jnp.tanh(y)
    return scale * y


def ann_reference_mixed(x, params, n_hidden, out_activation, scale,
                        mxu_dtype=jnp.bfloat16):
    """Reference mirroring the kernel's bf16-MXU / f32-accumulate numerics."""
    xd = x.astype(mxu_dtype)
    h = _silu(jnp.dot(xd, params["w_in"].astype(mxu_dtype),
                      preferred_element_type=jnp.float32) + params["b_in"])
    for l in range(n_hidden):
        h = _silu(jnp.dot(h.astype(mxu_dtype), params["w_h"][l].astype(mxu_dtype),
                          preferred_element_type=jnp.float32) + params["b_h"][l])
    y = jnp.dot(h.astype(mxu_dtype), params["w_out"].astype(mxu_dtype),
                preferred_element_type=jnp.float32) + params["b_out"]
    if out_activation == "tanh":
        y = jnp.tanh(y)
    return scale * y


if __name__ == "__main__":
    # Small shapes consistent with the module's forward:
    #   n_in=8, nNodes=32, nLayers=3 (=> 2 hidden->hidden layers), n_out=4
    #   activation='silu', out_activation='tanh', scale=1
    B, n_in, n_nodes, n_layers, n_out = 8, 8, 32, 3, 4
    out_activation, scale = "tanh", 1.0

    key = jax.random.PRNGKey(0)
    k_x, k_p = jax.random.split(key)
    x = jax.random.normal(k_x, (B, n_in), jnp.float32)
    params, n_hidden = init_ann_params(k_p, n_in, n_out, n_nodes, n_layers)

    y = ann_forward(x, params, n_hidden=n_hidden,
                    out_activation=out_activation, scale=scale)
    y = jax.block_until_ready(y)
    assert y.shape == (B, n_out)

    # Tight check vs a reference that mirrors the kernel's mixed precision.
    y_ref_mixed = ann_reference_mixed(x, params, n_hidden, out_activation, scale)
    assert jnp.allclose(y, y_ref_mixed, atol=2e-3, rtol=2e-3), \
        "mismatch vs mixed-precision JAX reference"

    # Looser check vs the pure-f32 module semantics (bf16 MXU quantization).
    y_ref_f32 = ann_reference_f32(x, params, n_hidden, out_activation, scale)
    assert jnp.allclose(y, y_ref_f32, atol=3e-2, rtol=3e-2), \
        "mismatch vs f32 JAX reference"

    print("KERNEL_OK")
</pallas_src>

<mosaic_0001>
module attributes {stable_mosaic.version = 11 : i64} {
  func.func @_ann_kernel(%arg0: i32, %arg1: memref<8x128xbf16, #tpu.memory_space<vmem>>, %arg2: memref<128x128xbf16, #tpu.memory_space<vmem>>, %arg3: memref<1x128xf32, #tpu.memory_space<vmem>>, %arg4: memref<2x128x128xbf16, #tpu.memory_space<vmem>>, %arg5: memref<2x1x128xf32, #tpu.memory_space<vmem>>, %arg6: memref<128x128xbf16, #tpu.memory_space<vmem>>, %arg7: memref<1x128xf32, #tpu.memory_space<vmem>>, %arg8: memref<8x128xf32, #tpu.memory_space<vmem>>) attributes {dimension_semantics = [#tpu.dimension_semantics<parallel>], iteration_bounds = array<i64: 1>, scalar_prefetch = 0 : i64, scratch_operands = 0 : i64, tpu.core_type = #tpu.core_type<tc>, window_params = [{transform_indices = @transform_0, window_bounds = array<i64: 8, 128>}, {pipeline_mode = #tpu.pipeline_mode<synchronous>, transform_indices = @transform_1, window_bounds = array<i64: 128, 128>}, {pipeline_mode = #tpu.pipeline_mode<synchronous>, transform_indices = @transform_2, window_bounds = array<i64: 1, 128>}, {pipeline_mode = #tpu.pipeline_mode<synchronous>, transform_indices = @transform_3, window_bounds = array<i64: 2, 128, 128>}, {pipeline_mode = #tpu.pipeline_mode<synchronous>, transform_indices = @transform_4, window_bounds = array<i64: 2, 1, 128>}, {pipeline_mode = #tpu.pipeline_mode<synchronous>, transform_indices = @transform_5, window_bounds = array<i64: 128, 128>}, {pipeline_mode = #tpu.pipeline_mode<synchronous>, transform_indices = @transform_6, window_bounds = array<i64: 1, 128>}, {transform_indices = @transform_7, window_bounds = array<i64: 8, 128>}]} {
    %c0 = arith.constant 0 : index
    %c0_0 = arith.constant 0 : index
    %0 = vector.load %arg1[%c0, %c0_0] : memref<8x128xbf16, #tpu.memory_space<vmem>>, vector<8x128xbf16>
    %c0_1 = arith.constant 0 : index
    %c0_2 = arith.constant 0 : index
    %1 = vector.load %arg2[%c0_1, %c0_2] : memref<128x128xbf16, #tpu.memory_space<vmem>>, vector<128x128xbf16>
    %cst = arith.constant dense<0.000000e+00> : vector<8x128xf32>
    %2 = tpu.matmul %0, %1, %cst {dimension_numbers = #tpu.dot_dimension_numbers<[1], [0], [0], [1], [0, 0, 1, 1], [], []>} : vector<8x128xbf16>, vector<128x128xbf16>, vector<8x128xf32> -> vector<8x128xf32>
    %c0_3 = arith.constant 0 : index
    %c0_4 = arith.constant 0 : index
    %3 = vector.load %arg3[%c0_3, %c0_4] : memref<1x128xf32, #tpu.memory_space<vmem>>, vector<1x128xf32>
    %4 = vector.broadcast %3 : vector<1x128xf32> to vector<8x128xf32>
    %5 = arith.addf %2, %4 : vector<8x128xf32>
    %6 = arith.negf %5 : vector<8x128xf32>
    %7 = math.exp %6 : vector<8x128xf32>
    %cst_5 = arith.constant 1.000000e+00 : f32
    %8 = vector.broadcast %cst_5 : f32 to vector<8x128xf32>
    %9 = arith.addf %8, %7 : vector<8x128xf32>
    %10 = arith.divf %8, %9 : vector<8x128xf32>
    %11 = arith.mulf %5, %10 : vector<8x128xf32>
    %12 = arith.truncf %11 : vector<8x128xf32> to vector<8x128xbf16>
    %c0_6 = arith.constant 0 : index
    %c0_7 = arith.constant 0 : index
    %c0_8 = arith.constant 0 : index
    %13 = vector.load %arg4[%c0_6, %c0_7, %c0_8] : memref<2x128x128xbf16, #tpu.memory_space<vmem>>, vector<1x128x128xbf16>
    %14 = vector.shape_cast %13 : vector<1x128x128xbf16> to vector<128x128xbf16>
    %cst_9 = arith.constant dense<0.000000e+00> : vector<8x128xf32>
    %15 = tpu.matmul %12, %14, %cst_9 {dimension_numbers = #tpu.dot_dimension_numbers<[1], [0], [0], [1], [0, 0, 1, 1], [], []>} : vector<8x128xbf16>, vector<128x128xbf16>, vector<8x128xf32> -> vector<8x128xf32>
    %c0_10 = arith.constant 0 : index
    %c0_11 = arith.constant 0 : index
    %c0_12 = arith.constant 0 : index
    %16 = vector.load %arg5[%c0_10, %c0_11, %c0_12] : memref<2x1x128xf32, #tpu.memory_space<vmem>>, vector<1x1x128xf32>
    %17 = vector.shape_cast %16 : vector<1x1x128xf32> to vector<1x128xf32>
    %18 = vector.broadcast %17 : vector<1x128xf32> to vector<8x128xf32>
    %19 = arith.addf %15, %18 : vector<8x128xf32>
    %20 = arith.negf %19 : vector<8x128xf32>
    %21 = math.exp %20 : vector<8x128xf32>
    %cst_13 = arith.constant 1.000000e+00 : f32
    %22 = vector.broadcast %cst_13 : f32 to vector<8x128xf32>
    %23 = arith.addf %22, %21 : vector<8x128xf32>
    %24 = arith.divf %22, %23 : vector<8x128xf32>
    %25 = arith.mulf %19, %24 : vector<8x128xf32>
    %26 = arith.truncf %25 : vector<8x128xf32> to vector<8x128xbf16>
    %c1 = arith.constant 1 : index
    %c0_14 = arith.constant 0 : index
    %c0_15 = arith.constant 0 : index
    %27 = vector.load %arg4[%c1, %c0_14, %c0_15] : memref<2x128x128xbf16, #tpu.memory_space<vmem>>, vector<1x128x128xbf16>
    %28 = vector.shape_cast %27 : vector<1x128x128xbf16> to vector<128x128xbf16>
    %cst_16 = arith.constant dense<0.000000e+00> : vector<8x128xf32>
    %29 = tpu.matmul %26, %28, %cst_16 {dimension_numbers = #tpu.dot_dimension_numbers<[1], [0], [0], [1], [0, 0, 1, 1], [], []>} : vector<8x128xbf16>, vector<128x128xbf16>, vector<8x128xf32> -> vector<8x128xf32>
    %c1_17 = arith.constant 1 : index
    %c0_18 = arith.constant 0 : index
    %c0_19 = arith.constant 0 : index
    %30 = vector.load %arg5[%c1_17, %c0_18, %c0_19] : memref<2x1x128xf32, #tpu.memory_space<vmem>>, vector<1x1x128xf32>
    %31 = vector.shape_cast %30 : vector<1x1x128xf32> to vector<1x128xf32>
    %32 = vector.broadcast %31 : vector<1x128xf32> to vector<8x128xf32>
    %33 = arith.addf %29, %32 : vector<8x128xf32>
    %34 = arith.negf %33 : vector<8x128xf32>
    %35 = math.exp %34 : vector<8x128xf32>
    %cst_20 = arith.constant 1.000000e+00 : f32
    %36 = vector.broadcast %cst_20 : f32 to vector<8x128xf32>
    %37 = arith.addf %36, %35 : vector<8x128xf32>
    %38 = arith.divf %36, %37 : vector<8x128xf32>
    %39 = arith.mulf %33, %38 : vector<8x128xf32>
    %40 = arith.truncf %39 : vector<8x128xf32> to vector<8x128xbf16>
    %c0_21 = arith.constant 0 : index
    %c0_22 = arith.constant 0 : index
    %41 = vector.load %arg6[%c0_21, %c0_22] : memref<128x128xbf16, #tpu.memory_space<vmem>>, vector<128x128xbf16>
    %cst_23 = arith.constant dense<0.000000e+00> : vector<8x128xf32>
    %42 = tpu.matmul %40, %41, %cst_23 {dimension_numbers = #tpu.dot_dimension_numbers<[1], [0], [0], [1], [0, 0, 1, 1], [], []>} : vector<8x128xbf16>, vector<128x128xbf16>, vector<8x128xf32> -> vector<8x128xf32>
    %c0_24 = arith.constant 0 : index
    %c0_25 = arith.constant 0 : index
    %43 = vector.load %arg7[%c0_24, %c0_25] : memref<1x128xf32, #tpu.memory_space<vmem>>, vector<1x128xf32>
    %44 = vector.broadcast %43 : vector<1x128xf32> to vector<8x128xf32>
    %45 = arith.addf %42, %44 : vector<8x128xf32>
    %46 = math.tanh %45 : vector<8x128xf32>
    %c0_26 = arith.constant 0 : index
    %c0_27 = arith.constant 0 : index
    %47 = vector.load %arg8[%c0_26, %c0_27] : memref<8x128xf32, #tpu.memory_space<vmem>>, vector<8x128xf32>
    tpu.vector_store %arg8[%c0_26, %c0_27], %46 {strides = array<i32>} : memref<8x128xf32, #tpu.memory_space<vmem>>, vector<8x128xf32>,
    return
  }
  func.func @transform_0(%arg0: i32) -> (i32, i32) {
    %c0_i32 = arith.constant 0 : i32
    %c0_i32_0 = arith.constant 0 : i32
    return %arg0, %c0_i32 : i32, i32
  }
  func.func @transform_1(%arg0: i32) -> (i32, i32) {
    %c0_i32 = arith.constant 0 : i32
    %c0_i32_0 = arith.constant 0 : i32
    %c0_i32_1 = arith.constant 0 : i32
    return %c0_i32, %c0_i32_0 : i32, i32
  }
  func.func @transform_2(%arg0: i32) -> (i32, i32) {
    %c0_i32 = arith.constant 0 : i32
    %c0_i32_0 = arith.constant 0 : i32
    %c0_i32_1 = arith.constant 0 : i32
    return %c0_i32, %c0_i32_0 : i32, i32
  }
  func.func @transform_3(%arg0: i32) -> (i32, i32, i32) {
    %c0_i32 = arith.constant 0 : i32
    %c0_i32_0 = arith.constant 0 : i32
    %c0_i32_1 = arith.constant 0 : i32
    %c0_i32_2 = arith.constant 0 : i32
    return %c0_i32, %c0_i32_0, %c0_i32_1 : i32, i32, i32
  }
  func.func @transform_4(%arg0: i32) -> (i32, i32, i32) {
    %c0_i32 = arith.constant 0 : i32
    %c0_i32_0 = arith.constant 0 : i32
    %c0_i32_1 = arith.constant 0 : i32
    %c0_i32_2 = arith.constant 0 : i32
    return %c0_i32, %c0_i32_0, %c0_i32_1 : i32, i32, i32
  }
  func.func @transform_5(%arg0: i32) -> (i32, i32) {
    %c0_i32 = arith.constant 0 : i32
    %c0_i32_0 = arith.constant 0 : i32
    %c0_i32_1 = arith.constant 0 : i32
    return %c0_i32, %c0_i32_0 : i32, i32
  }
  func.func @transform_6(%arg0: i32) -> (i32, i32) {
    %c0_i32 = arith.constant 0 : i32
    %c0_i32_0 = arith.constant 0 : i32
    %c0_i32_1 = arith.constant 0 : i32
    return %c0_i32, %c0_i32_0 : i32, i32
  }
  func.func @transform_7(%arg0: i32) -> (i32, i32) {
    %c0_i32 = arith.constant 0 : i32
    %c0_i32_0 = arith.constant 0 : i32
    return %arg0, %c0_i32 : i32, i32
  }
}

</mosaic_0001>

<llo_original>
// kernel: tpu_custom_call.1
$region0: #{tpu_custom_call.1}
  #allocation0 [shape = 'u32[]', space=smem, size = 0x4, offset = 0x4, fixed_abs, tag = 'smem constant byte address 0x4 - core index']
  #allocation1 [shape = 'u32[144,128]{1,0:T(1,128)}', space=vmem, size = 0x12000, scoped, tag = 'internal scratch']
  %s0 = inlined_call_operand.hbm [shape: bf16[8,128], index: 0, kind: input, shape index: {}]
  %s1 = inlined_call_operand.hbm [shape: bf16[128,128], index: 1, kind: input, shape index: {}]
  %s2 = inlined_call_operand.vmem [shape: f32[1,128], index: 2, kind: input, shape index: {}]
  %s3 = inlined_call_operand.hbm [shape: bf16[2,128,128], index: 3, kind: input, shape index: {}]
  %s4 = inlined_call_operand.vmem [shape: f32[2,1,128], index: 4, kind: input, shape index: {}]
  %s5 = inlined_call_operand.hbm [shape: bf16[128,128], index: 5, kind: input, shape index: {}]
  %s6 = inlined_call_operand.vmem [shape: f32[1,128], index: 6, kind: input, shape index: {}]
  %s7 = inlined_call_operand.hbm [shape: f32[8,128], index: 7, kind: output, shape index: {}]
  %s8 = sld [smem:[#allocation0]]
  $region54: #{tpu_custom_call.1} parent=0
    _
  %s10 = ssub.s32 1, %s8
  %s11 = scalar_select 0, %s10, %s8
  $region1: #{tpu_custom_call.1} parent=0
    #allocation2 [shape = 'u8[2048]{0}', space=vmem, size = 0x800, scoped, tag = 'input window, operand 0, single buffered']
    #allocation3 [shape = 's32[1]{0}', space=sflag, size = 0x4, scoped, tag = 'scoped memory for tpu_custom_call.1']
    #allocation4 [shape = 's32[1]{0}', space=sflag, size = 0x4, scoped, tag = 'scoped memory for tpu_custom_call.1']
    #allocation5 [shape = 'u8[32768]{0}', space=vmem, size = 0x8000, scoped, tag = 'input window, operand 1, single buffered']
    #allocation6 [shape = 's32[1]{0}', space=sflag, size = 0x4, scoped, tag = 'scoped memory for tpu_custom_call.1']
    #allocation7 [shape = 'u8[65536]{0}', space=vmem, size = 0x10000, scoped, tag = 'input window, operand 3, single buffered']
    #allocation8 [shape = 'u8[32768]{0}', space=vmem, size = 0x8000, scoped, tag = 'input window, operand 5, single buffered']
    #allocation9 [shape = 's32[1]{0}', space=sflag, size = 0x4, scoped, tag = 'scoped memory for tpu_custom_call.1']
    #allocation10 [shape = 'u8[4096]{0}', space=vmem, size = 0x1000, scoped, tag = 'output window, operand 0, single buffered']
    %12 = vsyncpa [#allocation3], 0
    %13 = vsyncpa [#allocation6], 0
    %14 = vsyncpa [#allocation9], 0
    %15 = vsyncpa [#allocation4], 0
    // Predicated region
    $region2: #{tpu_custom_call.1} parent=1 // pred_check
      _
    $region3: #{tpu_custom_call.1} parent=1 // pred_check_branch
      %17 = sbr.rel (0) target = $region5
    $region4: #{tpu_custom_call.1} parent=1 // pred_region
      %s19 = ssub.s32 64, 64
      %20 = vsyncadd [#allocation3], %s19
      %s22 = sshll.u32 [#allocation2], 4
      %s23 = int_to_ptr.vmem [resolvable:$true] %s22
      %25 = dma.hbm_to_vmem [thread:$0]  %s0, 64, %s23, [#allocation3]
    $region5: #{tpu_custom_call.1} parent=1 // pred_fallthru
      _
    // Predicated region
    $region6: #{tpu_custom_call.1} parent=1 // pred_check
      _
    $region7: #{tpu_custom_call.1} parent=1 // pred_check_branch
      %27 = sbr.rel (0) target = $region9
    $region8: #{tpu_custom_call.1} parent=1 // pred_region
      %s29 = ssub.s32 1024, 1024
      %30 = vsyncadd [#allocation6], %s29
      %s31 = sshll.u32 [#allocation5], 4
      %s32 = int_to_ptr.vmem [resolvable:$true] %s31
      %37 = dma.hbm_to_vmem [thread:$0]  %s1, 1024, %s32, [#allocation6], 64, 64, 4
    $region9: #{tpu_custom_call.1} parent=1 // pred_fallthru
      _
    // Predicated region
    $region10: #{tpu_custom_call.1} parent=1 // pred_check
      _
    $region11: #{tpu_custom_call.1} parent=1 // pred_check_branch
      %39 = sbr.rel (0) target = $region13
    $region12: #{tpu_custom_call.1} parent=1 // pred_region
      _
    $region13: #{tpu_custom_call.1} parent=1 // pred_fallthru
      _
    // Predicated region
    $region14: #{tpu_custom_call.1} parent=1 // pred_check
      _
    $region15: #{tpu_custom_call.1} parent=1 // pred_check_branch
      %41 = sbr.rel (0) target = $region17
    $region16: #{tpu_custom_call.1} parent=1 // pred_region
      %s43 = ssub.s32 2048, 2048
      %44 = vsyncadd [#allocation6], %s43
      %s45 = sshll.u32 [#allocation7], 4
      %s46 = int_to_ptr.vmem [resolvable:$true] %s45
      %51 = dma.hbm_to_vmem [thread:$0]  %s3, 2048, %s46, [#allocation6], 64, 64, 4
    $region17: #{tpu_custom_call.1} parent=1 // pred_fallthru
      _
    // Predicated region
    $region18: #{tpu_custom_call.1} parent=1 // pred_check
      _
    $region19: #{tpu_custom_call.1} parent=1 // pred_check_branch
      %53 = sbr.rel (0) target = $region21
    $region20: #{tpu_custom_call.1} parent=1 // pred_region
      _
    $region21: #{tpu_custom_call.1} parent=1 // pred_fallthru
      _
    // Predicated region
    $region22: #{tpu_custom_call.1} parent=1 // pred_check
      _
    $region23: #{tpu_custom_call.1} parent=1 // pred_check_branch
      %55 = sbr.rel (0) target = $region25
    $region24: #{tpu_custom_call.1} parent=1 // pred_region
      %s57 = ssub.s32 1024, 1024
      %58 = vsyncadd [#allocation9], %s57
      %s59 = sshll.u32 [#allocation8], 4
      %s60 = int_to_ptr.vmem [resolvable:$true] %s59
      %65 = dma.hbm_to_vmem [thread:$0]  %s5, 1024, %s60, [#allocation9], 64, 64, 4
    $region25: #{tpu_custom_call.1} parent=1 // pred_fallthru
      _
    // Predicated region
    $region26: #{tpu_custom_call.1} parent=1 // pred_check
      _
    $region27: #{tpu_custom_call.1} parent=1 // pred_check_branch
      %67 = sbr.rel (0) target = $region29
    $region28: #{tpu_custom_call.1} parent=1 // pred_region
      _
    $region29: #{tpu_custom_call.1} parent=1 // pred_fallthru
      _
    // Predicated region
    $region30: #{tpu_custom_call.1} parent=1 // pred_check
      _
    $region31: #{tpu_custom_call.1} parent=1 // pred_check_branch
      %69 = sbr.rel (0) target = $region33
    $region32: #{tpu_custom_call.1} parent=1 // pred_region
      %70 = dma.done [#allocation3], 64
    $region33: #{tpu_custom_call.1} parent=1 // pred_fallthru
      _
    // Predicated region
    $region34: #{tpu_custom_call.1} parent=1 // pred_check
      _
    $region35: #{tpu_custom_call.1} parent=1 // pred_check_branch
      %72 = sbr.rel (0) target = $region37
    $region36: #{tpu_custom_call.1} parent=1 // pred_region
      %73 = dma.done [#allocation6], 1024
    $region37: #{tpu_custom_call.1} parent=1 // pred_fallthru
      _
    // Predicated region
    $region38: #{tpu_custom_call.1} parent=1 // pred_check
      _
    $region39: #{tpu_custom_call.1} parent=1 // pred_check_branch
      %75 = sbr.rel (0) target = $region41
    $region40: #{tpu_custom_call.1} parent=1 // pred_region
      %76 = dma.done [#allocation6], 2048
    $region41: #{tpu_custom_call.1} parent=1 // pred_fallthru
      _
    // Predicated region
    $region42: #{tpu_custom_call.1} parent=1 // pred_check
      _
    $region43: #{tpu_custom_call.1} parent=1 // pred_check_branch
      %78 = sbr.rel (0) target = $region45
    $region44: #{tpu_custom_call.1} parent=1 // pred_region
      %79 = dma.done [#allocation9], 1024
    $region45: #{tpu_custom_call.1} parent=1 // pred_fallthru
      _
    %v81 = vld [vmem:[#allocation2] sm:$0xf]
    %v82 = vld [vmem:[#allocation5] sm:$0xf]
    %v83 = vld [vmem:[#allocation5 + $0x4] sm:$0xf]
    %v84 = vld [vmem:[#allocation5 + $0x8] sm:$0xf]
    %v85 = vld [vmem:[#allocation5 + $0xc] sm:$0xf]
    %v86 = vld [vmem:[#allocation5 + $0x10] sm:$0xf]
    %v87 = vld [vmem:[#allocation5 + $0x14] sm:$0xf]
    %v88 = vld [vmem:[#allocation5 + $0x18] sm:$0xf]
    %v89 = vld [vmem:[#allocation5 + $0x1c] sm:$0xf]
    %v90 = vld [vmem:[#allocation5 + $0x20] sm:$0xf]
    %v91 = vld [vmem:[#allocation5 + $0x24] sm:$0xf]
    %v92 = vld [vmem:[#allocation5 + $0x28] sm:$0xf]
    %v93 = vld [vmem:[#allocation5 + $0x2c] sm:$0xf]
    %v94 = vld [vmem:[#allocation5 + $0x30] sm:$0xf]
    %v95 = vld [vmem:[#allocation5 + $0x34] sm:$0xf]
    %v96 = vld [vmem:[#allocation5 + $0x38] sm:$0xf]
    %v97 = vld [vmem:[#allocation5 + $0x3c] sm:$0xf]
    %v98 = vld [vmem:[%s2] sm:$0x1]
    %v100 = vlaneseq
    %v101 = vshrl.u32 %v100, 7
    %v102 = vsub.s32 0, %v101
    %v103 = vrot.slane %v98, %v102
    %v121 = vunpack.c.l.b16 %v82
    %v122 = vunpack.c.l.b16 %v83
    %v123 = vunpack.c.l.b16 %v84
    %v124 = vunpack.c.l.b16 %v85
    %v125 = vunpack.c.l.b16 %v86
    %v126 = vunpack.c.l.b16 %v87
    %v127 = vunpack.c.l.b16 %v88
    %v128 = vunpack.c.l.b16 %v89
    %v129 = vunpack.c.l.b16 %v90
    %v130 = vunpack.c.l.b16 %v91
    %v131 = vunpack.c.l.b16 %v92
    %v132 = vunpack.c.l.b16 %v93
    %v133 = vunpack.c.l.b16 %v94
    %v134 = vunpack.c.l.b16 %v95
    %v135 = vunpack.c.l.b16 %v96
    %v136 = vunpack.c.l.b16 %v97
    %v137 = vpack.c.b16 %v122, %v121
    %v138 = vpack.c.b16 %v124, %v123
    %v139 = vpack.c.b16 %v126, %v125
    %v140 = vpack.c.b16 %v128, %v127
    %v141 = vpack.c.b16 %v130, %v129
    %v142 = vpack.c.b16 %v132, %v131
    %v143 = vpack.c.b16 %v134, %v133
    %v144 = vpack.c.b16 %v136, %v135
    %153 = vmatprep.subr.bf16.mxu0 0
    %154 = vmatpush1.bf16.msra.mxu0 %v144
    %155 = vmatprep.subr.bf16.mxu0 0
    %156 = vmatpush1.bf16.msra.mxu0 %v143
    %157 = vmatprep.subr.bf16.mxu0 0
    %158 = vmatpush1.bf16.msra.mxu0 %v142
    %159 = vmatprep.subr.bf16.mxu0 0
    %160 = vmatpush1.bf16.msra.mxu0 %v141
    %161 = vmatprep.subr.bf16.mxu0 0
    %162 = vmatpush1.bf16.msra.mxu0 %v140
    %163 = vmatprep.subr.bf16.mxu0 0
    %164 = vmatpush1.bf16.msra.mxu0 %v139
    %165 = vmatprep.subr.bf16.mxu0 0
    %166 = vmatpush1.bf16.msra.mxu0 %v138
    %167 = vmatprep.subr.bf16.mxu0 0
    %168 = vmatpush1.bf16.msra.mxu0 %v137
    %169 = vmatprep.subr.bf16.mxu0 0
    %170 = vmatpush2.bf16.msra.mxu0 0
    %171 = vmatprep.subr.bf16.mxu0 0
    %172 = vmatpush2.bf16.msra.mxu0 0
    %173 = vmatprep.subr.bf16.mxu0 0
    %174 = vmatpush2.bf16.msra.mxu0 0
    %175 = vmatprep.subr.bf16.mxu0 0
    %176 = vmatpush2.bf16.msra.mxu0 0
    %177 = vmatprep.subr.bf16.mxu0 0
    %178 = vmatpush2.bf16.msra.mxu0 0
    %179 = vmatprep.subr.bf16.mxu0 0
    %180 = vmatpush2.bf16.msra.mxu0 0
    %181 = vmatprep.subr.bf16.mxu0 0
    %182 = vmatpush2.bf16.msra.mxu0 0
    %183 = vmatprep.subr.bf16.mxu0 0
    %184 = vmatpush2.bf16.msra.mxu0 0
    %185 = vmatprep.mubr.bf16.mxu0 0
    %186 = vmatmul.mubr.bf16.gmra.mxu0 %v81
    %v187 = vpop.f32.mrf.mxu0
    %v188 = vadd.f32 %v103, %v187
    %v189 = vpop.f32.mrf.mxu0
    %v190 = vpop.f32.mrf.mxu0
    %v191 = vpop.f32.mrf.mxu0
    %192 = vdwg.mxu0
    %v193 = vxor.u32 %v188, 2147483648
    %v194 = vmul.f32 %v193, 1.442695
    %v195 = vpow.pop %v194
    %v196 = vadd.f32 %v195, 1.0
    %v197 = vrcp.pop %v196
    %v198 = vmul.f32 1.0, %v197
    %v199 = vmul.f32 %v188, %v198
    %v200 = vpack.c.bf16 %v199, %v199
    %v201 = vld [vmem:[#allocation7] sm:$0xf]
    %v202 = vld [vmem:[#allocation7 + $0x4] sm:$0xf]
    %v203 = vld [vmem:[#allocation7 + $0x8] sm:$0xf]
    %v204 = vld [vmem:[#allocation7 + $0xc] sm:$0xf]
    %v205 = vld [vmem:[#allocation7 + $0x10] sm:$0xf]
    %v206 = vld [vmem:[#allocation7 + $0x14] sm:$0xf]
    %v207 = vld [vmem:[#allocation7 + $0x18] sm:$0xf]
    %v208 = vld [vmem:[#allocation7 + $0x1c] sm:$0xf]
    %v209 = vld [vmem:[#allocation7 + $0x20] sm:$0xf]
    %v210 = vld [vmem:[#allocation7 + $0x24] sm:$0xf]
    %v211 = vld [vmem:[#allocation7 + $0x28] sm:$0xf]
    %v212 = vld [vmem:[#allocation7 + $0x2c] sm:$0xf]
    %v213 = vld [vmem:[#allocation7 + $0x30] sm:$0xf]
    %v214 = vld [vmem:[#allocation7 + $0x34] sm:$0xf]
    %v215 = vld [vmem:[#allocation7 + $0x38] sm:$0xf]
    %v216 = vld [vmem:[#allocation7 + $0x3c] sm:$0xf]
    %v217 = vld [vmem:[%s4] sm:$0x1]
    %v219 = vlaneseq
    %v220 = vshrl.u32 %v219, 7
    %v221 = vsub.s32 0, %v220
    %v222 = vrot.slane %v217, %v221
    %v240 = vunpack.c.l.b16 %v201
    %v241 = vunpack.c.l.b16 %v202
    %v242 = vunpack.c.l.b16 %v203
    %v243 = vunpack.c.l.b16 %v204
    %v244 = vunpack.c.l.b16 %v205
    %v245 = vunpack.c.l.b16 %v206
    %v246 = vunpack.c.l.b16 %v207
    %v247 = vunpack.c.l.b16 %v208
    %v248 = vunpack.c.l.b16 %v209
    %v249 = vunpack.c.l.b16 %v210
    %v250 = vunpack.c.l.b16 %v211
    %v251 = vunpack.c.l.b16 %v212
    %v252 = vunpack.c.l.b16 %v213
    %v253 = vunpack.c.l.b16 %v214
    %v254 = vunpack.c.l.b16 %v215
    %v255 = vunpack.c.l.b16 %v216
    %v256 = vpack.c.b16 %v241, %v240
    %v257 = vpack.c.b16 %v243, %v242
    %v258 = vpack.c.b16 %v245, %v244
    %v259 = vpack.c.b16 %v247, %v246
    %v260 = vpack.c.b16 %v249, %v248
    %v261 = vpack.c.b16 %v251, %v250
    %v262 = vpack.c.b16 %v253, %v252
    %v263 = vpack.c.b16 %v255, %v254
    %272 = vmatprep.subr.bf16.mxu0 0
    %273 = vmatpush1.bf16.msra.mxu0 %v263
    %274 = vmatprep.subr.bf16.mxu0 0
    %275 = vmatpush1.bf16.msra.mxu0 %v262
    %276 = vmatprep.subr.bf16.mxu0 0
    %277 = vmatpush1.bf16.msra.mxu0 %v261
    %278 = vmatprep.subr.bf16.mxu0 0
    %279 = vmatpush1.bf16.msra.mxu0 %v260
    %280 = vmatprep.subr.bf16.mxu0 0
    %281 = vmatpush1.bf16.msra.mxu0 %v259
    %282 = vmatprep.subr.bf16.mxu0 0
    %283 = vmatpush1.bf16.msra.mxu0 %v258
    %284 = vmatprep.subr.bf16.mxu0 0
    %285 = vmatpush1.bf16.msra.mxu0 %v257
    %286 = vmatprep.subr.bf16.mxu0 0
    %287 = vmatpush1.bf16.msra.mxu0 %v256
    %288 = vmatprep.subr.bf16.mxu0 0
    %289 = vmatpush2.bf16.msra.mxu0 0
    %290 = vmatprep.subr.bf16.mxu0 0
    %291 = vmatpush2.bf16.msra.mxu0 0
    %292 = vmatprep.subr.bf16.mxu0 0
    %293 = vmatpush2.bf16.msra.mxu0 0
    %294 = vmatprep.subr.bf16.mxu0 0
    %295 = vmatpush2.bf16.msra.mxu0 0
    %296 = vmatprep.subr.bf16.mxu0 0
    %297 = vmatpush2.bf16.msra.mxu0 0
    %298 = vmatprep.subr.bf16.mxu0 0
    %299 = vmatpush2.bf16.msra.mxu0 0
    %300 = vmatprep.subr.bf16.mxu0 0
    %301 = vmatpush2.bf16.msra.mxu0 0
    %302 = vmatprep.subr.bf16.mxu0 0
    %303 = vmatpush2.bf16.msra.mxu0 0
    %304 = vmatprep.mubr.bf16.mxu0 0
    %305 = vmatmul.mubr.bf16.gmra.mxu0 %v200
    %v306 = vpop.f32.mrf.mxu0
    %v307 = vadd.f32 %v222, %v306
    %v308 = vpop.f32.mrf.mxu0
    %v309 = vpop.f32.mrf.mxu0
    %v310 = vpop.f32.mrf.mxu0
    %311 = vdwg.mxu0
    %v312 = vxor.u32 %v307, 2147483648
    %v313 = vmul.f32 %v312, 1.442695
    %v314 = vpow.pop %v313
    %v315 = vadd.f32 %v314, 1.0
    %v316 = vrcp.pop %v315
    %v317 = vmul.f32 1.0, %v316
    %v318 = vmul.f32 %v307, %v317
    %v319 = vpack.c.bf16 %v318, %v318
    %s320 = scalar_lea.vmem [#allocation7], 64
    %v321 = vld [vmem:[%s320] sm:$0xf]
    %v322 = vld [vmem:[%s320 + $0x4] sm:$0xf]
    %v323 = vld [vmem:[%s320 + $0x8] sm:$0xf]
    %v324 = vld [vmem:[%s320 + $0xc] sm:$0xf]
    %v325 = vld [vmem:[%s320 + $0x10] sm:$0xf]
    %v326 = vld [vmem:[%s320 + $0x14] sm:$0xf]
    %v327 = vld [vmem:[%s320 + $0x18] sm:$0xf]
    %v328 = vld [vmem:[%s320 + $0x1c] sm:$0xf]
    %v329 = vld [vmem:[%s320 + $0x20] sm:$0xf]
    %v330 = vld [vmem:[%s320 + $0x24] sm:$0xf]
    %v331 = vld [vmem:[%s320 + $0x28] sm:$0xf]
    %v332 = vld [vmem:[%s320 + $0x2c] sm:$0xf]
    %v333 = vld [vmem:[%s320 + $0x30] sm:$0xf]
    %v334 = vld [vmem:[%s320 + $0x34] sm:$0xf]
    %v335 = vld [vmem:[%s320 + $0x38] sm:$0xf]
    %v336 = vld [vmem:[%s320 + $0x3c] sm:$0xf]
    %s337 = scalar_lea.vmem %s4, 1
    %v338 = vld [vmem:[%s337] sm:$0x1]
    %v340 = vlaneseq
    %v341 = vshrl.u32 %v340, 7
    %v342 = vsub.s32 0, %v341
    %v343 = vrot.slane %v338, %v342
    %v361 = vunpack.c.l.b16 %v321
    %v362 = vunpack.c.l.b16 %v322
    %v363 = vunpack.c.l.b16 %v323
    %v364 = vunpack.c.l.b16 %v324
    %v365 = vunpack.c.l.b16 %v325
    %v366 = vunpack.c.l.b16 %v326
    %v367 = vunpack.c.l.b16 %v327
    %v368 = vunpack.c.l.b16 %v328
    %v369 = vunpack.c.l.b16 %v329
    %v370 = vunpack.c.l.b16 %v330
    %v371 = vunpack.c.l.b16 %v331
    %v372 = vunpack.c.l.b16 %v332
    %v373 = vunpack.c.l.b16 %v333
    %v374 = vunpack.c.l.b16 %v334
    %v375 = vunpack.c.l.b16 %v335
    %v376 = vunpack.c.l.b16 %v336
    %v377 = vpack.c.b16 %v362, %v361
    %v378 = vpack.c.b16 %v364, %v363
    %v379 = vpack.c.b16 %v366, %v365
    %v380 = vpack.c.b16 %v368, %v367
    %v381 = vpack.c.b16 %v370, %v369
    %v382 = vpack.c.b16 %v372, %v371
    %v383 = vpack.c.b16 %v374, %v373
    %v384 = vpack.c.b16 %v376, %v375
    %393 = vmatprep.subr.bf16.mxu0 0
    %394 = vmatpush1.bf16.msra.mxu0 %v384
    %395 = vmatprep.subr.bf16.mxu0 0
    %396 = vmatpush1.bf16.msra.mxu0 %v383
    %397 = vmatprep.subr.bf16.mxu0 0
    %398 = vmatpush1.bf16.msra.mxu0 %v382
    %399 = vmatprep.subr.bf16.mxu0 0
    %400 = vmatpush1.bf16.msra.mxu0 %v381
    %401 = vmatprep.subr.bf16.mxu0 0
    %402 = vmatpush1.bf16.msra.mxu0 %v380
    %403 = vmatprep.subr.bf16.mxu0 0
    %404 = vmatpush1.bf16.msra.mxu0 %v379
    %405 = vmatprep.subr.bf16.mxu0 0
    %406 = vmatpush1.bf16.msra.mxu0 %v378
    %407 = vmatprep.subr.bf16.mxu0 0
    %408 = vmatpush1.bf16.msra.mxu0 %v377
    %409 = vmatprep.subr.bf16.mxu0 0
    %410 = vmatpush2.bf16.msra.mxu0 0
    %411 = vmatprep.subr.bf16.mxu0 0
    %412 = vmatpush2.bf16.msra.mxu0 0
    %413 = vmatprep.subr.bf16.mxu0 0
    %414 = vmatpush2.bf16.msra.mxu0 0
    %415 = vmatprep.subr.bf16.mxu0 0
    %416 = vmatpush2.bf16.msra.mxu0 0
    %417 = vmatprep.subr.bf16.mxu0 0
    %418 = vmatpush2.bf16.msra.mxu0 0
    %419 = vmatprep.subr.bf16.mxu0 0
    %420 = vmatpush2.bf16.msra.mxu0 0
    %421 = vmatprep.subr.bf16.mxu0 0
    %422 = vmatpush2.bf16.msra.mxu0 0
    %423 = vmatprep.subr.bf16.mxu0 0
    %424 = vmatpush2.bf16.msra.mxu0 0
    %425 = vmatprep.mubr.bf16.mxu0 0
    %426 = vmatmul.mubr.bf16.gmra.mxu0 %v319
    %v427 = vpop.f32.mrf.mxu0
    %v428 = vadd.f32 %v343, %v427
    %v429 = vpop.f32.mrf.mxu0
    %v430 = vpop.f32.mrf.mxu0
    %v431 = vpop.f32.mrf.mxu0
    %432 = vdwg.mxu0
    %v433 = vxor.u32 %v428, 2147483648
    %v434 = vmul.f32 %v433, 1.442695
    %v435 = vpow.pop %v434
    %v436 = vadd.f32 %v435, 1.0
    %v437 = vrcp.pop %v436
    %v438 = vmul.f32 1.0, %v437
    %v439 = vmul.f32 %v428, %v438
    %v440 = vpack.c.bf16 %v439, %v439
    %v441 = vld [vmem:[#allocation8] sm:$0xf]
    %v442 = vld [vmem:[#allocation8 + $0x4] sm:$0xf]
    %v443 = vld [vmem:[#allocation8 + $0x8] sm:$0xf]
    %v444 = vld [vmem:[#allocation8 + $0xc] sm:$0xf]
    %v445 = vld [vmem:[#allocation8 + $0x10] sm:$0xf]
    %v446 = vld [vmem:[#allocation8 + $0x14] sm:$0xf]
    %v447 = vld [vmem:[#allocation8 + $0x18] sm:$0xf]
    %v448 = vld [vmem:[#allocation8 + $0x1c] sm:$0xf]
    %v449 = vld [vmem:[#allocation8 + $0x20] sm:$0xf]
    %v450 = vld [vmem:[#allocation8 + $0x24] sm:$0xf]
    %v451 = vld [vmem:[#allocation8 + $0x28] sm:$0xf]
    %v452 = vld [vmem:[#allocation8 + $0x2c] sm:$0xf]
    %v453 = vld [vmem:[#allocation8 + $0x30] sm:$0xf]
    %v454 = vld [vmem:[#allocation8 + $0x34] sm:$0xf]
    %v455 = vld [vmem:[#allocation8 + $0x38] sm:$0xf]
    %v456 = vld [vmem:[#allocation8 + $0x3c] sm:$0xf]
    %v457 = vld [vmem:[%s6] sm:$0x1]
    %v459 = vlaneseq
    %v460 = vshrl.u32 %v459, 7
    %v461 = vsub.s32 0, %v460
    %v462 = vrot.slane %v457, %v461
    %v480 = vunpack.c.l.b16 %v441
    %v481 = vunpack.c.l.b16 %v442
    %v482 = vunpack.c.l.b16 %v443
    %v483 = vunpack.c.l.b16 %v444
    %v484 = vunpack.c.l.b16 %v445
    %v485 = vunpack.c.l.b16 %v446
    %v486 = vunpack.c.l.b16 %v447
    %v487 = vunpack.c.l.b16 %v448
    %v488 = vunpack.c.l.b16 %v449
    %v489 = vunpack.c.l.b16 %v450
    %v490 = vunpack.c.l.b16 %v451
    %v491 = vunpack.c.l.b16 %v452
    %v492 = vunpack.c.l.b16 %v453
    %v493 = vunpack.c.l.b16 %v454
    %v494 = vunpack.c.l.b16 %v455
    %v495 = vunpack.c.l.b16 %v456
    %v496 = vpack.c.b16 %v481, %v480
    %v497 = vpack.c.b16 %v483, %v482
    %v498 = vpack.c.b16 %v485, %v484
    %v499 = vpack.c.b16 %v487, %v486
    %v500 = vpack.c.b16 %v489, %v488
    %v501 = vpack.c.b16 %v491, %v490
    %v502 = vpack.c.b16 %v493, %v492
    %v503 = vpack.c.b16 %v495, %v494
    %512 = vmatprep.subr.bf16.mxu0 0
    %513 = vmatpush1.bf16.msra.mxu0 %v503
    %514 = vmatprep.subr.bf16.mxu0 0
    %515 = vmatpush1.bf16.msra.mxu0 %v502
    %516 = vmatprep.subr.bf16.mxu0 0
    %517 = vmatpush1.bf16.msra.mxu0 %v501
    %518 = vmatprep.subr.bf16.mxu0 0
    %519 = vmatpush1.bf16.msra.mxu0 %v500
    %520 = vmatprep.subr.bf16.mxu0 0
    %521 = vmatpush1.bf16.msra.mxu0 %v499
    %522 = vmatprep.subr.bf16.mxu0 0
    %523 = vmatpush1.bf16.msra.mxu0 %v498
    %524 = vmatprep.subr.bf16.mxu0 0
    %525 = vmatpush1.bf16.msra.mxu0 %v497
    %526 = vmatprep.subr.bf16.mxu0 0
    %527 = vmatpush1.bf16.msra.mxu0 %v496
    %528 = vmatprep.subr.bf16.mxu0 0
    %529 = vmatpush2.bf16.msra.mxu0 0
    %530 = vmatprep.subr.bf16.mxu0 0
    %531 = vmatpush2.bf16.msra.mxu0 0
    %532 = vmatprep.subr.bf16.mxu0 0
    %533 = vmatpush2.bf16.msra.mxu0 0
    %534 = vmatprep.subr.bf16.mxu0 0
    %535 = vmatpush2.bf16.msra.mxu0 0
    %536 = vmatprep.subr.bf16.mxu0 0
    %537 = vmatpush2.bf16.msra.mxu0 0
    %538 = vmatprep.subr.bf16.mxu0 0
    %539 = vmatpush2.bf16.msra.mxu0 0
    %540 = vmatprep.subr.bf16.mxu0 0
    %541 = vmatpush2.bf16.msra.mxu0 0
    %542 = vmatprep.subr.bf16.mxu0 0
    %543 = vmatpush2.bf16.msra.mxu0 0
    %544 = vmatprep.mubr.bf16.mxu0 0
    %545 = vmatmul.mubr.bf16.gmra.mxu0 %v440
    %v546 = vpop.f32.mrf.mxu0
    %v547 = vadd.f32 %v462, %v546
    %v548 = vpop.f32.mrf.mxu0
    %v549 = vpop.f32.mrf.mxu0
    %v550 = vpop.f32.mrf.mxu0
    %551 = vdwg.mxu0
    %v552 = vtanh.pop %v547
    %553 = vst [vmem:[#allocation10] sm:$0xff] %v552
    // Predicated region
    $region46: #{tpu_custom_call.1} parent=1 // pred_check
      _
    $region47: #{tpu_custom_call.1} parent=1 // pred_check_branch
      %555 = sbr.rel (0) target = $region49
    $region48: #{tpu_custom_call.1} parent=1 // pred_region
      %s557 = ssub.s32 128, 128
      %558 = vsyncadd [#allocation4], %s557
      %s560 = sshll.u32 [#allocation10], 4
      %s561 = int_to_ptr.vmem [resolvable:$true] %s560
      %563 = dma.vmem_to_hbm [thread:$0]  %s561, 128, %s7, [#allocation4]
    $region49: #{tpu_custom_call.1} parent=1 // pred_fallthru
      _
    // Predicated region
    $region50: #{tpu_custom_call.1} parent=1 // pred_check
      _
    $region51: #{tpu_custom_call.1} parent=1 // pred_check_branch
      %565 = sbr.rel (0) target = $region53
    $region52: #{tpu_custom_call.1} parent=1 // pred_region
      %566 = dma.done [#allocation4], 128
    $region53: #{tpu_custom_call.1} parent=1 // pred_fallthru
      _
    %567 = vsyncpa [#allocation3], 1
    %568 = vsyncpa [#allocation6], 1
    %569 = vsyncpa [#allocation9], 1
    %570 = vsyncpa [#allocation4], 1

</llo_original>
